<compile_context>
chip_gen: v6e
topology: v6e:2x2x1
jax: 0.10.0
libtpu: 0.0.40
codegen_flags: <defaults>
</compile_context>

<pallas_src>
import functools
import math

import jax
import jax.numpy as jnp
import numpy as np
from jax.experimental import pallas as pl
from jax.experimental.pallas import tpu as pltpu


# ----------------------------------------------------------------------------- #
# Kernel
# ----------------------------------------------------------------------------- #
def _gat_fused_kernel(src_ref, rel_ref, pat_ref, w_ref, out_ref, *,
                      tile_n, num_nbrs, num_heads, neg_slope):
    """One destination-node tile; all heads and all neighbors fused."""
    tnk = tile_n * num_nbrs
    n_pad = rel_ref.shape[0]
    H = num_heads

    # --- Gather source-node features from the VMEM-resident node table with a
    # one-hot matmul (bf16 is exact for the 0/1 selector; MXU-friendly). ---
    node_ids = jax.lax.broadcasted_iota(jnp.int32, (tnk, n_pad), 1)
    onehot = (node_ids == src_ref[...]).astype(jnp.bfloat16)               # [TNK, Np]
    h_src = jnp.dot(onehot, rel_ref[...],
                    preferred_element_type=jnp.float32)                    # [TNK, I] f32

    # Elementwise math in f32 (v5e-safe); MXU operand downcast to bf16.
    hp = h_src * pat_ref[...].astype(jnp.float32)                          # [TNK, I]
    hp_bf = hp.astype(jnp.bfloat16)

    # --- One fused MXU pass for both per-head quantities sharing the hp LHS:
    #   cols [0:H)   -> head_sum = hp @ W_sum   (== sum_o of the message z1)
    #   cols [H:2H)  -> e_src    = hp @ (W @ a[:O])
    es = jnp.dot(hp_bf, w_ref[:, :2 * H],
                 preferred_element_type=jnp.float32)                       # [TNK, 2H]
    head_sum = es[:, :H]                                                   # [TNK, H]
    e_src = es[:, H:]                                                      # [TNK, H]

    # --- Destination-node term sliced from the already-resident table (no extra
    # DMA stream / duplicated rel input). ---
    start = pl.multiple_of(pl.program_id(0) * tile_n, 8)
    rel_dst = rel_ref[pl.ds(start, tile_n), :]                             # [TN, I] bf16
    e_dst = jnp.dot(rel_dst, w_ref[:, 2 * H:],
                    preferred_element_type=jnp.float32)                    # [TN, H]

    e = e_src.reshape(tile_n, num_nbrs, H) + e_dst[:, None, :]             # [TN,K,H]
    e = jnp.where(e > 0, e, neg_slope * e)                                 # leaky_relu

    # Softmax over the mailbox (K) axis, per destination node and head.
    m = jnp.max(e, axis=1, keepdims=True)
    p = jnp.exp(e - m)
    alpha = p * pl.reciprocal(jnp.sum(p, axis=1, keepdims=True), approx=True)

    # Only the scalar mean is needed:
    #   sum_{k,o} alpha_k * z1_{k,o} == sum_k alpha_k * head_sum_k.
    weighted = alpha * head_sum.reshape(tile_n, num_nbrs, H)               # [TN,K,H]
    out_ref[...] = jnp.sum(weighted, keepdims=True)                        # (1,1,1)


# ----------------------------------------------------------------------------- #
# Tiling helpers (VMEM-aware, megacore-friendly)
# ----------------------------------------------------------------------------- #
def _ceil_to(x, m):
    return ((x + m - 1) // m) * m


def _padded_bytes(rows, cols, itemsize):
    return _ceil_to(max(rows, 1), 8) * _ceil_to(max(cols, 1), 128) * itemsize


def _vmem_bytes(tile_n, k, n_pad, in_dim, num_heads):
    """Rough per-step VMEM footprint: pipelined inputs (x2 buffers) + the large
    compiler-managed temporaries (one-hot gather matrix, hp, softmax temps)."""
    tnk = tile_n * k
    b = 0
    b += 2 * _padded_bytes(tnk, 1, 4)                       # src ids
    b += 2 * _padded_bytes(n_pad, in_dim, 2)                # rel table (bf16)
    b += 2 * _padded_bytes(tnk, in_dim, 2)                  # pattern tile (bf16)
    b += 2 * _padded_bytes(in_dim, 3 * num_heads, 2)        # fused params
    b += 2 * _padded_bytes(8, 128, 4)                       # tiny output blocks
    b += _padded_bytes(tnk, n_pad, 2)                       # one-hot (bf16)
    b += 3 * _padded_bytes(tnk, in_dim, 4)                  # h_src / hp / casts
    b += 4 * _padded_bytes(tile_n * k, num_heads, 4)        # softmax temporaries
    return b


def _choose_tile_n(n_nodes, k, in_dim, num_heads,
                   target_edges=4096, vmem_budget=40 << 20):
    """Largest 8-aligned node tile with <= target_edges edges that fits the VMEM
    budget while keeping >=2 grid steps (v7x megacore).  Ragged N is handled by
    padding up to a tile multiple in the wrapper (padded rows contribute 0)."""
    best = 8
    tile_n = 8
    while True:
        tnk = tile_n * k
        n_pad = _ceil_to(n_nodes, tile_n)
        num_tiles = n_pad // tile_n
        if tnk > target_edges:
            break
        if num_tiles < 2 and n_nodes > 8:
            break
        if _vmem_bytes(tile_n, k, n_pad, in_dim, num_heads) > vmem_budget:
            break
        best = tile_n
        if num_tiles == 1:
            break
        tile_n += 8
    return best


# ----------------------------------------------------------------------------- #
# Wrapper
# ----------------------------------------------------------------------------- #
def multi_head_gat_forward(rel, pattern, src_idx, W_all, A_all):
    """rel: [N, in_dim], pattern: [N, K, in_dim], src_idx: [N, K] int32,
    W_all: [H, in_dim, out_dim] (fc.weight.T per head),
    A_all: [H, 2*out_dim] (attn_fc.weight per head).  Returns a scalar."""
    N, in_dim = rel.shape
    _, K, _ = pattern.shape
    H, _, out_dim = W_all.shape

    tile_n = _choose_tile_n(N, K, in_dim, H)
    n_pad = _ceil_to(N, tile_n)
    num_tiles = n_pad // tile_n
    tnk = tile_n * K

    # ---- Parameter / layout prep (tiny XLA plumbing, no per-edge work). ----
    # Pre-contracted per-head vectors (scalar-mean simplification + attention):
    #   W_sum[i,h] = sum_o W[h,i,o];  WA1 = W @ a[:O];  WA2 = W @ a[O:].
    W_sum = jnp.sum(W_all, axis=2).T                                       # [I, H]
    WA1 = jnp.einsum('hio,ho->ih', W_all, A_all[:, :out_dim])              # [I, H]
    WA2 = jnp.einsum('hio,ho->ih', W_all, A_all[:, out_dim:])              # [I, H]
    W_fused = jnp.concatenate([W_sum, WA1, WA2], axis=1).astype(jnp.bfloat16)

    rel_p = rel.astype(jnp.bfloat16)
    pattern_flat = pattern.reshape(N * K, in_dim).astype(jnp.bfloat16)     # edge-major
    src_col = src_idx.reshape(N * K, 1).astype(jnp.int32)

    pad_nodes = n_pad - N
    if pad_nodes:
        # Zero-padded tail rows: hp==0, e==0 -> softmax is finite, contribution 0.
        rel_p = jnp.concatenate(
            [rel_p, jnp.zeros((pad_nodes, in_dim), jnp.bfloat16)], axis=0)
        pattern_flat = jnp.concatenate(
            [pattern_flat, jnp.zeros((pad_nodes * K, in_dim), jnp.bfloat16)], axis=0)
        src_col = jnp.concatenate(
            [src_col, jnp.zeros((pad_nodes * K, 1), jnp.int32)], axis=0)

    vmem_need = _vmem_bytes(tile_n, K, n_pad, in_dim, H)
    vmem_limit = int(min(48 << 20, max(2 * vmem_need, 32 << 20)))

    kernel = functools.partial(
        _gat_fused_kernel, tile_n=tile_n, num_nbrs=K, num_heads=H,
        neg_slope=0.01)

    partials = pl.pallas_call(
        kernel,
        out_shape=jax.ShapeDtypeStruct((num_tiles, 1, 1), jnp.float32),
        grid_spec=pltpu.PrefetchScalarGridSpec(
            num_scalar_prefetch=0,
            grid=(num_tiles,),
            in_specs=[
                pl.BlockSpec((tnk, 1), lambda i: (i, 0)),              # src ids (tile)
                pl.BlockSpec((n_pad, in_dim), lambda i: (0, 0)),       # rel table (all nodes)
                pl.BlockSpec((tnk, in_dim), lambda i: (i, 0)),         # pattern (tile)
                pl.BlockSpec((in_dim, 3 * H), lambda i: (0, 0)),       # [W_sum|WA1|WA2]
            ],
            out_specs=pl.BlockSpec((1, 1, 1), lambda i: (i, 0, 0)),
        ),
        compiler_params=pltpu.CompilerParams(
            dimension_semantics=("parallel",),
            vmem_limit_bytes=vmem_limit),
    )(src_col, rel_p, pattern_flat, W_fused)

    # torch.mean(torch.stack(head_outs)) == global sum / (H * N * out_dim).
    return jnp.sum(partials) / float(H * N * out_dim)


# ----------------------------------------------------------------------------- #
# Pure-JAX reference (mirrors the PyTorch/DGL semantics, f32)
# ----------------------------------------------------------------------------- #
def _reference(rel, pattern, src_idx, W_all, A_all):
    H, _, out_dim = W_all.shape
    hs = rel[src_idx]                                                      # [N, K, I]
    outs = []
    for h in range(H):
        W = W_all[h]
        a = A_all[h]
        z1 = jnp.einsum('nki,io->nko', hs * pattern, W)                    # [N, K, O]
        zdst = rel @ W                                                     # [N, O]
        e = jnp.einsum('nko,o->nk', z1, a[:out_dim]) + (zdst @ a[out_dim:])[:, None]
        e = jnp.where(e > 0, e, 0.01 * e)
        alpha = jax.nn.softmax(e, axis=-1)
        outs.append(jnp.sum(alpha[..., None] * z1, axis=1))
    return jnp.mean(jnp.stack(outs))


if __name__ == "__main__":
    N, K = 16, 8          # nodes, in-degree per node (E = N*K = 128 edges)
    in_dim, out_dim = 16, 32
    num_heads = 3

    key = jax.random.PRNGKey(0)
    k_w, k_a, k_rel, k_pat = jax.random.split(key, 4)

    # Deterministic "nn.Linear(bias=False)"-shaped parameters per head.
    W_all = (jax.random.normal(k_w, (num_heads, in_dim, out_dim), jnp.float32)
             * (1.0 / math.sqrt(in_dim)))                 # fc.weight.T per head
    A_all = (jax.random.normal(k_a, (num_heads, 2 * out_dim), jnp.float32)
             * (1.0 / math.sqrt(2 * out_dim)))            # attn_fc.weight per head

    rel = jax.random.normal(k_rel, (N, in_dim), jnp.float32)
    pattern = jax.random.normal(k_pat, (N, K, in_dim), jnp.float32)

    # Deterministic regular graph: node v receives edges from (v+k) % N.
    src_idx = ((jnp.arange(N)[:, None] + jnp.arange(K)[None, :]) % N).astype(jnp.int32)

    out = jax.block_until_ready(
        multi_head_gat_forward(rel, pattern, src_idx, W_all, A_all))
    ref = jax.block_until_ready(_reference(rel, pattern, src_idx, W_all, A_all))

    # Tolerances loosened vs. the f32 version: MXU operands (rel/pattern/params)
    # are bf16 and the softmax uses the approximate EUP reciprocal.
    np.testing.assert_allclose(np.asarray(out), np.asarray(ref),
                               rtol=5e-2, atol=5e-3)

    print("KERNEL_OK")
</pallas_src>

<mosaic_0001>
module attributes {stable_mosaic.version = 11 : i64} {
  func.func @_gat_fused_kernel(%arg0: i32, %arg1: memref<64x1xi32, #tpu.memory_space<vmem>>, %arg2: memref<16x16xbf16, #tpu.memory_space<vmem>>, %arg3: memref<64x16xbf16, #tpu.memory_space<vmem>>, %arg4: memref<16x9xbf16, #tpu.memory_space<vmem>>, %arg5: memref<1x1x1xf32, #tpu.memory_space<vmem>>) attributes {dimension_semantics = [#tpu.dimension_semantics<parallel>], iteration_bounds = array<i64: 2>, scalar_prefetch = 0 : i64, scratch_operands = 0 : i64, tpu.core_type = #tpu.core_type<tc>, window_params = [{transform_indices = @transform_0, window_bounds = array<i64: 64, 1>}, {pipeline_mode = #tpu.pipeline_mode<synchronous>, transform_indices = @transform_1, window_bounds = array<i64: 16, 16>}, {transform_indices = @transform_2, window_bounds = array<i64: 64, 16>}, {pipeline_mode = #tpu.pipeline_mode<synchronous>, transform_indices = @transform_3, window_bounds = array<i64: 16, 9>}, {transform_indices = @transform_4, window_bounds = array<i64: 1, 1, 1>}]} {
    %0 = tpu.iota {dimensions = array<i32: 1>} : vector<64x16xi32>
    %c0 = arith.constant 0 : index
    %c0_0 = arith.constant 0 : index
    %1 = vector.load %arg1[%c0, %c0_0] : memref<64x1xi32, #tpu.memory_space<vmem>>, vector<64x1xi32>
    %2 = vector.broadcast %1 : vector<64x1xi32> to vector<64x16xi32>
    %3 = arith.cmpi eq, %0, %2 : vector<64x16xi32>
    %4 = arith.extui %3 : vector<64x16xi1> to vector<64x16xi32>
    %5 = arith.sitofp %4 : vector<64x16xi32> to vector<64x16xf32>
    %6 = arith.truncf %5 : vector<64x16xf32> to vector<64x16xbf16>
    %c0_1 = arith.constant 0 : index
    %c0_2 = arith.constant 0 : index
    %7 = vector.load %arg2[%c0_1, %c0_2] : memref<16x16xbf16, #tpu.memory_space<vmem>>, vector<16x16xbf16>
    %cst = arith.constant dense<0.000000e+00> : vector<64x16xf32>
    %8 = tpu.matmul %6, %7, %cst {dimension_numbers = #tpu.dot_dimension_numbers<[1], [0], [0], [1], [0, 0, 1, 1], [], []>} : vector<64x16xbf16>, vector<16x16xbf16>, vector<64x16xf32> -> vector<64x16xf32>
    %c0_3 = arith.constant 0 : index
    %c0_4 = arith.constant 0 : index
    %9 = vector.load %arg3[%c0_3, %c0_4] : memref<64x16xbf16, #tpu.memory_space<vmem>>, vector<64x16xbf16>
    %10 = arith.extf %9 : vector<64x16xbf16> to vector<64x16xf32>
    %11 = arith.mulf %8, %10 : vector<64x16xf32>
    %12 = arith.truncf %11 : vector<64x16xf32> to vector<64x16xbf16>
    %c0_5 = arith.constant 0 : index
    %c0_6 = arith.constant 0 : index
    %13 = vector.load %arg4[%c0_5, %c0_6] : memref<16x9xbf16, #tpu.memory_space<vmem>>, vector<16x6xbf16>
    %cst_7 = arith.constant dense<0.000000e+00> : vector<64x6xf32>
    %14 = tpu.matmul %12, %13, %cst_7 {dimension_numbers = #tpu.dot_dimension_numbers<[1], [0], [0], [1], [0, 0, 1, 1], [], []>} : vector<64x16xbf16>, vector<16x6xbf16>, vector<64x6xf32> -> vector<64x6xf32>
    %15 = vector.extract_strided_slice %14 {offsets = [0, 0], sizes = [64, 3], strides = [1, 1]} : vector<64x6xf32> to vector<64x3xf32>
    %16 = vector.extract_strided_slice %14 {offsets = [0, 3], sizes = [64, 3], strides = [1, 1]} : vector<64x6xf32> to vector<64x3xf32>
    %c8_i32 = arith.constant 8 : i32
    %17 = arith.muli %arg0, %c8_i32 : i32
    %18 = tpu.assume_multiple %17, 8 : i32
    %19 = arith.index_cast %18 : i32 to index
    %c0_8 = arith.constant 0 : index
    %20 = vector.load %arg2[%19, %c0_8] : memref<16x16xbf16, #tpu.memory_space<vmem>>, vector<8x16xbf16>
    %c0_9 = arith.constant 0 : index
    %c6 = arith.constant 6 : index
    %21 = vector.load %arg4[%c0_9, %c6] : memref<16x9xbf16, #tpu.memory_space<vmem>>, vector<16x3xbf16>
    %cst_10 = arith.constant dense<0.000000e+00> : vector<8x3xf32>
    %22 = tpu.matmul %20, %21, %cst_10 {dimension_numbers = #tpu.dot_dimension_numbers<[1], [0], [0], [1], [0, 0, 1, 1], [], []>} : vector<8x16xbf16>, vector<16x3xbf16>, vector<8x3xf32> -> vector<8x3xf32>
    %23 = vector.shape_cast %16 : vector<64x3xf32> to vector<8x8x3xf32>
    %24 = vector.shape_cast %22 : vector<8x3xf32> to vector<8x1x3xf32>
    %25 = vector.broadcast %24 : vector<8x1x3xf32> to vector<8x8x3xf32>
    %26 = arith.addf %23, %25 : vector<8x8x3xf32>
    %cst_11 = arith.constant 0.000000e+00 : f32
    %27 = vector.broadcast %cst_11 : f32 to vector<8x8x3xf32>
    %28 = arith.cmpf ogt, %26, %27 : vector<8x8x3xf32>
    %cst_12 = arith.constant 0.00999999977 : f32
    %29 = vector.broadcast %cst_12 : f32 to vector<8x8x3xf32>
    %30 = arith.mulf %29, %26 : vector<8x8x3xf32>
    %31 = arith.select %28, %26, %30 : vector<8x8x3xi1>, vector<8x8x3xf32>
    %cst_13 = arith.constant dense<0xFF800000> : vector<8x3xf32>
    %32 = vector.multi_reduction <maximumf>, %31, %cst_13 [1] : vector<8x8x3xf32> to vector<8x3xf32>
    %33 = vector.shape_cast %32 : vector<8x3xf32> to vector<8x1x3xf32>
    %34 = vector.broadcast %33 : vector<8x1x3xf32> to vector<8x8x3xf32>
    %35 = arith.subf %31, %34 : vector<8x8x3xf32>
    %36 = math.exp %35 : vector<8x8x3xf32>
    %cst_14 = arith.constant dense<0.000000e+00> : vector<8x3xf32>
    %37 = vector.multi_reduction <add>, %36, %cst_14 [1] : vector<8x8x3xf32> to vector<8x3xf32>
    %38 = vector.shape_cast %37 : vector<8x3xf32> to vector<8x1x3xf32>
    %39 = tpu.reciprocal %38 {approx = true} : vector<8x1x3xf32> -> vector<8x1x3xf32>
    %40 = vector.broadcast %39 : vector<8x1x3xf32> to vector<8x8x3xf32>
    %41 = arith.mulf %36, %40 : vector<8x8x3xf32>
    %42 = vector.shape_cast %15 : vector<64x3xf32> to vector<8x8x3xf32>
    %43 = arith.mulf %41, %42 : vector<8x8x3xf32>
    %44 = vector.shape_cast %43 : vector<8x8x3xf32> to vector<1x8x8x3xf32>
    %cst_15 = arith.constant dense<0.000000e+00> : vector<1xf32>
    %45 = vector.multi_reduction <add>, %44, %cst_15 [1, 2, 3] : vector<1x8x8x3xf32> to vector<1xf32>
    %46 = vector.shape_cast %45 : vector<1xf32> to vector<1x1x1x1xf32>
    %47 = vector.extract %46[0, 0, 0, 0] : f32 from vector<1x1x1x1xf32>
    %48 = vector.broadcast %47 : f32 to vector<1x1x1xf32>
    %c0_16 = arith.constant 0 : index
    %c0_17 = arith.constant 0 : index
    %c0_18 = arith.constant 0 : index
    %49 = vector.load %arg5[%c0_16, %c0_17, %c0_18] : memref<1x1x1xf32, #tpu.memory_space<vmem>>, vector<1x1x1xf32>
    tpu.vector_store %arg5[%c0_16, %c0_17, %c0_18], %48 {strides = array<i32>} : memref<1x1x1xf32, #tpu.memory_space<vmem>>, vector<1x1x1xf32>,
    return
  }
  func.func @transform_0(%arg0: i32) -> (i32, i32) {
    %c0_i32 = arith.constant 0 : i32
    %c0_i32_0 = arith.constant 0 : i32
    return %arg0, %c0_i32 : i32, i32
  }
  func.func @transform_1(%arg0: i32) -> (i32, i32) {
    %c0_i32 = arith.constant 0 : i32
    %c0_i32_0 = arith.constant 0 : i32
    %c0_i32_1 = arith.constant 0 : i32
    return %c0_i32, %c0_i32_0 : i32, i32
  }
  func.func @transform_2(%arg0: i32) -> (i32, i32) {
    %c0_i32 = arith.constant 0 : i32
    %c0_i32_0 = arith.constant 0 : i32
    return %arg0, %c0_i32 : i32, i32
  }
  func.func @transform_3(%arg0: i32) -> (i32, i32) {
    %c0_i32 = arith.constant 0 : i32
    %c0_i32_0 = arith.constant 0 : i32
    %c0_i32_1 = arith.constant 0 : i32
    return %c0_i32, %c0_i32_0 : i32, i32
  }
  func.func @transform_4(%arg0: i32) -> (i32, i32, i32) {
    %c0_i32 = arith.constant 0 : i32
    %c0_i32_0 = arith.constant 0 : i32
    %c0_i32_1 = arith.constant 0 : i32
    return %arg0, %c0_i32, %c0_i32_0 : i32, i32, i32
  }
}

</mosaic_0001>

<llo_original>
// kernel: tpu_custom_call.1
$region0: #{tpu_custom_call.1}
  #allocation0 [shape = 'u32[]', space=smem, size = 0x4, offset = 0x4, fixed_abs, tag = 'smem constant byte address 0x4 - core index']
  #allocation1 [shape = 'u32[144,128]{1,0:T(1,128)}', space=vmem, size = 0x12000, scoped, tag = 'internal scratch']
  %s0 = inlined_call_operand.vmem [shape: s32[128,1], index: 0, kind: input, shape index: {}]
  %s1 = inlined_call_operand.vmem [shape: bf16[16,16], index: 1, kind: input, shape index: {}]
  %s2 = inlined_call_operand.vmem [shape: bf16[128,16], index: 2, kind: input, shape index: {}]
  %s3 = inlined_call_operand.vmem [shape: bf16[16,9], index: 3, kind: input, shape index: {}]
  %s4 = inlined_call_operand.vmem [shape: f32[2,1,1], index: 4, kind: output, shape index: {}]
  %s5 = sld [smem:[#allocation0]]
  $region49: #{tpu_custom_call.1} parent=0
    _
  %s7 = ssub.s32 1, %s5
  %s8 = scalar_select 0, %s7, %s5
  loop: start=0, step=1, limit=4
  $region2: #{tpu_custom_call.1} parent=0 // loop_pre_header
    _
  $region3: #{tpu_custom_call.1} parent=0 // loop_header
    %s10 = sphi 0, %s14
    %p11 = scmp.ge.s32.totalorder %s10, 4
    %s20 = sphi 0, %s22
    %s23 = sphi 0, %s20
    %s24 = sphi 0, %s23
    %s40 = sphi 0, %s24
    %s44 = sphi 0, %s44
    %s46 = sphi 0, %s44
    %s47 = sphi 0, %s46
    %s61 = sphi 0, %s47
    %s67 = sphi 0, %s69
    %s70 = sphi 0, %s67
    %s71 = sphi 0, %s70
    %s87 = sphi 0, %s71
    %s91 = sphi 0, %s91
    %s93 = sphi 0, %s91
    %s94 = sphi 0, %s93
    %s108 = sphi 0, %s94
    %s114 = sphi 0, %s116
    %s117 = sphi 0, %s114
    %s118 = sphi 0, %s117
    %s134 = sphi 0, %s118
  $region4: #{tpu_custom_call.1} parent=0 // loop_header_branch
    %13 = sbr.rel (%p11) target = $region8
  $region5: #{tpu_custom_call.1} parent=0 // loop_body
    %s15 = ssub.s32 %s10, 1
    %s16 = ssub.s32 %s10, 2
    %s17 = sadd.s32 %s10, 1
    %s18 = ssub.s32 %s10, %s17
    %p19 = scmp.eq.s32.totalorder %s18, 0
    %s21 = sadd.s32 %s20, 1
    %s22 = scalar_select %p19, %s20, %s21
    %p25 = pneg %p19
    %p26 = scmp.eq.s32.totalorder %s10, 1
    %p27 = por %p25, %p26
    %p28 = scmp.ne.s32.totalorder %s20, %s23
    %p29 = scmp.eq.s32.totalorder %s10, 0
    %p30 = por %p28, %p29
    %p31 = scmp.ne.s32.totalorder %s20, %s23
    %p32 = scmp.eq.s32.totalorder %s15, 1
    %p33 = por %p31, %p32
    %p34 = scmp.ne.s32.totalorder %s23, %s24
    %p35 = scmp.eq.s32.totalorder %s15, 0
    %p36 = por %p34, %p35
    %p37 = scmp.ne.s32.totalorder %s23, %s24
    %p38 = scmp.eq.s32.totalorder %s16, 1
    %p39 = por %p37, %p38
    %p41 = scmp.ne.s32.totalorder %s24, %s40
    %p42 = scmp.eq.s32.totalorder %s16, 0
    %p43 = por %p41, %p42
    %s45 = sadd.s32 %s44, 1
    %p48 = scmp.eq.s32.totalorder %s10, 1
    %p49 = scmp.ne.s32.totalorder %s44, %s46
    %p50 = scmp.eq.s32.totalorder %s10, 0
    %p51 = por %p49, %p50
    %p52 = scmp.ne.s32.totalorder %s44, %s46
    %p53 = scmp.eq.s32.totalorder %s15, 1
    %p54 = por %p52, %p53
    %p55 = scmp.ne.s32.totalorder %s46, %s47
    %p56 = scmp.eq.s32.totalorder %s15, 0
    %p57 = por %p55, %p56
    %p58 = scmp.ne.s32.totalorder %s46, %s47
    %p59 = scmp.eq.s32.totalorder %s16, 1
    %p60 = por %p58, %p59
    %p62 = scmp.ne.s32.totalorder %s47, %s61
    %p63 = scmp.eq.s32.totalorder %s16, 0
    %p64 = por %p62, %p63
    %s65 = ssub.s32 %s10, %s17
    %p66 = scmp.eq.s32.totalorder %s65, 0
    %s68 = sadd.s32 %s67, 1
    %s69 = scalar_select %p66, %s67, %s68
    %p72 = pneg %p66
    %p73 = scmp.eq.s32.totalorder %s10, 1
    %p74 = por %p72, %p73
    %p75 = scmp.ne.s32.totalorder %s67, %s70
    %p76 = scmp.eq.s32.totalorder %s10, 0
    %p77 = por %p75, %p76
    %p78 = scmp.ne.s32.totalorder %s67, %s70
    %p79 = scmp.eq.s32.totalorder %s15, 1
    %p80 = por %p78, %p79
    %p81 = scmp.ne.s32.totalorder %s70, %s71
    %p82 = scmp.eq.s32.totalorder %s15, 0
    %p83 = por %p81, %p82
    %p84 = scmp.ne.s32.totalorder %s70, %s71
    %p85 = scmp.eq.s32.totalorder %s16, 1
    %p86 = por %p84, %p85
    %p88 = scmp.ne.s32.totalorder %s71, %s87
    %p89 = scmp.eq.s32.totalorder %s16, 0
    %p90 = por %p88, %p89
    %s92 = sadd.s32 %s91, 1
    %p95 = scmp.eq.s32.totalorder %s10, 1
    %p96 = scmp.ne.s32.totalorder %s91, %s93
    %p97 = scmp.eq.s32.totalorder %s10, 0
    %p98 = por %p96, %p97
    %p99 = scmp.ne.s32.totalorder %s91, %s93
    %p100 = scmp.eq.s32.totalorder %s15, 1
    %p101 = por %p99, %p100
    %p102 = scmp.ne.s32.totalorder %s93, %s94
    %p103 = scmp.eq.s32.totalorder %s15, 0
    %p104 = por %p102, %p103
    %p105 = scmp.ne.s32.totalorder %s93, %s94
    %p106 = scmp.eq.s32.totalorder %s16, 1
    %p107 = por %p105, %p106
    %p109 = scmp.ne.s32.totalorder %s94, %s108
    %p110 = scmp.eq.s32.totalorder %s16, 0
    %p111 = por %p109, %p110
    %s112 = ssub.s32 %s10, %s17
    %p113 = scmp.eq.s32.totalorder %s112, 0
    %s115 = sadd.s32 %s114, 1
    %s116 = scalar_select %p113, %s114, %s115
    %p119 = pneg %p113
    %p120 = scmp.eq.s32.totalorder %s10, 1
    %p121 = por %p119, %p120
    %p122 = scmp.ne.s32.totalorder %s114, %s117
    %p123 = scmp.eq.s32.totalorder %s10, 0
    %p124 = por %p122, %p123
    %p125 = scmp.ne.s32.totalorder %s114, %s117
    %p126 = scmp.eq.s32.totalorder %s15, 1
    %p127 = por %p125, %p126
    %p128 = scmp.ne.s32.totalorder %s117, %s118
    %p129 = scmp.eq.s32.totalorder %s15, 0
    %p130 = por %p128, %p129
    %p131 = scmp.ne.s32.totalorder %s117, %s118
    %p132 = scmp.eq.s32.totalorder %s16, 1
    %p133 = por %p131, %p132
    %p135 = scmp.ne.s32.totalorder %s118, %s134
    %p136 = scmp.eq.s32.totalorder %s16, 0
    %p137 = por %p135, %p136
    %p138 = scmp.le.s32.totalorder 1, %s10
    %p139 = scmp.lt.s32.totalorder %s10, 3
    %p140 = pnand %p138, %p139
    %p141 = pneg %p140
    // Predicated region
    $region9: #{tpu_custom_call.1} parent=5 // pred_check
      _
    $region10: #{tpu_custom_call.1} parent=5 // pred_check_branch
      %143 = sbr.rel (%p140) target = $region12
    $region11: #{tpu_custom_call.1} parent=5 // pred_region
      %s144 = ssub.s32 %s10, 1
      // Predicated region
      $region13: #{tpu_custom_call.1} parent=11 // pred_check
        %p145 = pneg %p57
      $region14: #{tpu_custom_call.1} parent=11 // pred_check_branch
        %147 = sbr.rel (%p145) target = $region16
      $region15: #{tpu_custom_call.1} parent=11 // pred_region
        _
      $region16: #{tpu_custom_call.1} parent=11 // pred_fallthru
        _
      // Predicated region
      $region17: #{tpu_custom_call.1} parent=11 // pred_check
        %p148 = pneg %p104
      $region18: #{tpu_custom_call.1} parent=11 // pred_check_branch
        %150 = sbr.rel (%p148) target = $region20
      $region19: #{tpu_custom_call.1} parent=11 // pred_region
        _
      $region20: #{tpu_custom_call.1} parent=11 // pred_fallthru
        _
    $region12: #{tpu_custom_call.1} parent=5 // pred_fallthru
      _
    %p151 = scmp.lt.s32.totalorder %s10, 2
    // Predicated region
    $region21: #{tpu_custom_call.1} parent=5 // pred_check
      %p152 = pneg %p151
    $region22: #{tpu_custom_call.1} parent=5 // pred_check_branch
      %154 = sbr.rel (%p152) target = $region24
    $region23: #{tpu_custom_call.1} parent=5 // pred_region
      // Predicated region
      $region25: #{tpu_custom_call.1} parent=23 // pred_check
        %p155 = pneg %p30
      $region26: #{tpu_custom_call.1} parent=23 // pred_check_branch
        %157 = sbr.rel (%p155) target = $region28
      $region27: #{tpu_custom_call.1} parent=23 // pred_region
        %s158 = smul.u32 8, %s10
        %p159 = scmp.lt.s32.totalorder %s158, 15
        %s160 = scalar_select %p159, %s158, 15
        %s161 = smul.addr %s160, 8
        %s162 = scalar_lea.vmem %s0, %s161
        %s163 = smul.u32 8, %s10
      $region28: #{tpu_custom_call.1} parent=23 // pred_fallthru
        _
      // Predicated region
      $region29: #{tpu_custom_call.1} parent=23 // pred_check
        %p164 = pneg %p77
      $region30: #{tpu_custom_call.1} parent=23 // pred_check_branch
        %166 = sbr.rel (%p164) target = $region32
      $region31: #{tpu_custom_call.1} parent=23 // pred_region
        %s167 = smul.u32 8, %s10
        %p168 = scmp.lt.s32.totalorder %s167, 15
        %s169 = scalar_select %p168, %s167, 15
        %s170 = smul.addr %s169, 4
        %s171 = scalar_lea.vmem %s2, %s170
        %s172 = smul.u32 8, %s10
      $region32: #{tpu_custom_call.1} parent=23 // pred_fallthru
        _
    $region24: #{tpu_custom_call.1} parent=5 // pred_fallthru
      _
    %p173 = scmp.le.s32.totalorder 1, %s10
    %p174 = scmp.lt.s32.totalorder %s10, 3
    %p175 = pnand %p173, %p174
    %p176 = pneg %p175
    // Predicated region
    $region33: #{tpu_custom_call.1} parent=5 // pred_check
      _
    $region34: #{tpu_custom_call.1} parent=5 // pred_check_branch
      %178 = sbr.rel (%p175) target = $region36
    $region35: #{tpu_custom_call.1} parent=5 // pred_region
      %s179 = ssub.s32 %s10, 1
      %s180 = smul.u32 8, %s15
      %p181 = scmp.lt.s32.totalorder %s180, 15
      %s182 = scalar_select %p181, %s180, 15
      %s183 = smul.addr %s182, 8
      %s184 = scalar_lea.vmem %s0, %s183
      %p185 = pneg %p36
      %p186 = pneg %p33
      %p187 = pneg %p57
      %p188 = pneg %p54
      %s189 = smul.u32 8, %s15
      %p190 = scmp.lt.s32.totalorder %s189, 15
      %s191 = scalar_select %p190, %s189, 15
      %s192 = smul.addr %s191, 4
      %s193 = scalar_lea.vmem %s2, %s192
      %p194 = pneg %p83
      %p195 = pneg %p80
      %p196 = pneg %p104
      %p197 = pneg %p101
      %p198 = pneg %p130
      %p199 = pneg %p127
      %p200 = scmp.lt.s32.totalorder %s15, 1
      %s201 = scalar_select %p200, %s15, 1
      %s202 = scalar_lea.vmem %s4, %s201
      %s203 = smul.u32 8, %s15
      %p204 = scmp.lt.s32.totalorder %s203, 15
      %s205 = scalar_select %p204, %s203, 15
      %s206 = smul.addr %s205, 8
      %s207 = scalar_lea.vmem %s0, %s206
      %s208 = smul.u32 8, %s15
      %s209 = smul.u32 8, %s15
      %p210 = scmp.lt.s32.totalorder %s209, 15
      %s211 = scalar_select %p210, %s209, 15
      %s212 = smul.addr %s211, 4
      %s213 = scalar_lea.vmem %s2, %s212
      %s214 = smul.u32 8, %s15
      %p215 = scmp.lt.s32.totalorder %s15, 1
      %s216 = scalar_select %p215, %s15, 1
      %s217 = scalar_lea.vmem %s4, %s216
      %v219 = vlaneseq
      %v220 = vand.u32 %v219, 127
      %v221 = vld [vmem:[%s207] sm:$0xff]
      %v222 = vld [vmem:[%s207 + $0x8] sm:$0xff]
      %v223 = vld [vmem:[%s207 + $0x10] sm:$0xff]
      %v224 = vld [vmem:[%s207 + $0x18] sm:$0xff]
      %v225 = vld [vmem:[%s207 + $0x20] sm:$0xff]
      %v226 = vld [vmem:[%s207 + $0x28] sm:$0xff]
      %v227 = vld [vmem:[%s207 + $0x30] sm:$0xff]
      %v228 = vld [vmem:[%s207 + $0x38] sm:$0xff]
      %229 = vset.pattern.permute.xlu0 0
      %230 = vperm.xlu0 %229, %v221
      %v231 = vpop.permute.xlu0 %230
      %232 = vset.pattern.permute.xlu0 0
      %233 = vperm.xlu0 %232, %v222
      %v234 = vpop.permute.xlu0 %233
      %235 = vset.pattern.permute.xlu0 0
      %236 = vperm.xlu0 %235, %v223
      %v237 = vpop.permute.xlu0 %236
      %238 = vset.pattern.permute.xlu0 0
      %239 = vperm.xlu0 %238, %v224
      %v240 = vpop.permute.xlu0 %239
      %241 = vset.pattern.permute.xlu0 0
      %242 = vperm.xlu0 %241, %v225
      %v243 = vpop.permute.xlu0 %242
      %244 = vset.pattern.permute.xlu0 0
      %245 = vperm.xlu0 %244, %v226
      %v246 = vpop.permute.xlu0 %245
      %247 = vset.pattern.permute.xlu0 0
      %248 = vperm.xlu0 %247, %v227
      %v249 = vpop.permute.xlu0 %248
      %250 = vset.pattern.permute.xlu0 0
      %251 = vperm.xlu0 %250, %v228
      %v252 = vpop.permute.xlu0 %251
      %vm253 = vcmp.eq.s32.totalorder %v220, %v231
      %vm254 = vcmp.eq.s32.totalorder %v220, %v234
      %vm255 = vcmp.eq.s32.totalorder %v220, %v237
      %vm256 = vcmp.eq.s32.totalorder %v220, %v240
      %vm257 = vcmp.eq.s32.totalorder %v220, %v243
      %vm258 = vcmp.eq.s32.totalorder %v220, %v246
      %vm259 = vcmp.eq.s32.totalorder %v220, %v249
      %vm260 = vcmp.eq.s32.totalorder %v220, %v252
      %v261 = vsel %vm253, 1, 0
      %v262 = vsel %vm254, 1, 0
      %v263 = vsel %vm255, 1, 0
      %v264 = vsel %vm256, 1, 0
      %v265 = vsel %vm257, 1, 0
      %v266 = vsel %vm258, 1, 0
      %v267 = vsel %vm259, 1, 0
      %v268 = vsel %vm260, 1, 0
      %v269 = vcvt.s32.f32 %v261
      %v270 = vcvt.s32.f32 %v262
      %v271 = vcvt.s32.f32 %v263
      %v272 = vcvt.s32.f32 %v264
      %v273 = vcvt.s32.f32 %v265
      %v274 = vcvt.s32.f32 %v266
      %v275 = vcvt.s32.f32 %v267
      %v276 = vcvt.s32.f32 %v268
      %v277 = vpack.c.bf16 %v270, %v269
      %v278 = vpack.c.bf16 %v272, %v271
      %v279 = vpack.c.bf16 %v274, %v273
      %v280 = vpack.c.bf16 %v276, %v275
      %v281 = vld [vmem:[%s1] sm:$0xf]
      %v282 = vld [vmem:[%s1 + $0x4] sm:$0xf]
      %v285 = vunpack.c.l.b16 %v281
      %v286 = vunpack.c.l.b16 %v282
      %v287 = vpack.c.b16 %v286, %v285
      %vm289 = vcmask 130048
      %v291 = vsel %vm289, %v277, 0
      %v294 = vsel %vm289, %v278, 0
      %v297 = vsel %vm289, %v279, 0
      %v300 = vsel %vm289, %v280, 0
      %302 = vmatprep.subr.bf16.mxu0 0
      %303 = vmatpush1.bf16.msra.mxu0 0
      %304 = vmatprep.subr.bf16.mxu0 0
      %305 = vmatpush1.bf16.msra.mxu0 0
      %306 = vmatprep.subr.bf16.mxu0 0
      %307 = vmatpush1.bf16.msra.mxu0 0
      %308 = vmatprep.subr.bf16.mxu0 0
      %309 = vmatpush1.bf16.msra.mxu0 0
      %310 = vmatprep.subr.bf16.mxu0 0
      %311 = vmatpush1.bf16.msra.mxu0 0
      %312 = vmatprep.subr.bf16.mxu0 0
      %313 = vmatpush1.bf16.msra.mxu0 0
      %314 = vmatprep.subr.bf16.mxu0 0
      %315 = vmatpush1.bf16.msra.mxu0 0
      %316 = vmatprep.subr.bf16.mxu0 0
      %317 = vmatpush1.bf16.msra.mxu0 %v287
      %318 = vmatprep.subr.bf16.mxu0 0
      %319 = vmatpush2.bf16.msra.mxu0 0
      %320 = vmatprep.subr.bf16.mxu0 0
      %321 = vmatpush2.bf16.msra.mxu0 0
      %322 = vmatprep.subr.bf16.mxu0 0
      %323 = vmatpush2.bf16.msra.mxu0 0
      %324 = vmatprep.subr.bf16.mxu0 0
      %325 = vmatpush2.bf16.msra.mxu0 0
      %326 = vmatprep.subr.bf16.mxu0 0
      %327 = vmatpush2.bf16.msra.mxu0 0
      %328 = vmatprep.subr.bf16.mxu0 0
      %329 = vmatpush2.bf16.msra.mxu0 0
      %330 = vmatprep.subr.bf16.mxu0 0
      %331 = vmatpush2.bf16.msra.mxu0 0
      %332 = vmatprep.subr.bf16.mxu0 0
      %333 = vmatpush2.bf16.msra.mxu0 0
      %334 = vmatprep.mubr.bf16.mxu0 0
      %335 = vmatmul.mubr.bf16.gmra.mxu0 %v291
      %v336 = vpop.f32.mrf.mxu0
      %v337 = vadd.f32 0.0, %v336
      %v338 = vpop.f32.mrf.mxu0
      %v339 = vpop.f32.mrf.mxu0
      %v340 = vadd.f32 0.0, %v339
      %v341 = vpop.f32.mrf.mxu0
      %342 = vmatprep.mubr.bf16.mxu0 0
      %343 = vmatmul.mubr.bf16.gmra.mxu0 %v294
      %v344 = vpop.f32.mrf.mxu0
      %v345 = vadd.f32 0.0, %v344
      %v346 = vpop.f32.mrf.mxu0
      %v347 = vpop.f32.mrf.mxu0
      %v348 = vadd.f32 0.0, %v347
      %v349 = vpop.f32.mrf.mxu0
      %350 = vmatprep.mubr.bf16.mxu0 0
      %351 = vmatmul.mubr.bf16.gmra.mxu0 %v297
      %v352 = vpop.f32.mrf.mxu0
      %v353 = vadd.f32 0.0, %v352
      %v354 = vpop.f32.mrf.mxu0
      %v355 = vpop.f32.mrf.mxu0
      %v356 = vadd.f32 0.0, %v355
      %v357 = vpop.f32.mrf.mxu0
      %358 = vmatprep.mubr.bf16.mxu0 0
      %359 = vmatmul.mubr.bf16.gmra.mxu0 %v300
      %v360 = vpop.f32.mrf.mxu0
      %v361 = vadd.f32 0.0, %v360
      %v362 = vpop.f32.mrf.mxu0
      %v363 = vpop.f32.mrf.mxu0
      %v364 = vadd.f32 0.0, %v363
      %v365 = vpop.f32.mrf.mxu0
      %366 = vdwg.mxu0
      %v367 = vld [vmem:[%s213] sm:$0xf]
      %v368 = vld [vmem:[%s213 + $0x4] sm:$0xf]
      %v369 = vld [vmem:[%s213 + $0x8] sm:$0xf]
      %v370 = vld [vmem:[%s213 + $0xc] sm:$0xf]
      %v371 = vld [vmem:[%s213 + $0x10] sm:$0xf]
      %v372 = vld [vmem:[%s213 + $0x14] sm:$0xf]
      %v373 = vld [vmem:[%s213 + $0x18] sm:$0xf]
      %v374 = vld [vmem:[%s213 + $0x1c] sm:$0xf]
      %v375 = vunpack.c.l.bf16 %v367
      %v376 = vunpack.c.l.bf16 %v368
      %v377 = vunpack.c.l.bf16 %v369
      %v378 = vunpack.c.l.bf16 %v370
      %v379 = vunpack.c.l.bf16 %v371
      %v380 = vunpack.c.l.bf16 %v372
      %v381 = vunpack.c.l.bf16 %v373
      %v382 = vunpack.c.l.bf16 %v374
      %v383 = vmul.f32 %v337, %v375
      %v384 = vmul.f32 %v340, %v376
      %v385 = vmul.f32 %v345, %v377
      %v386 = vmul.f32 %v348, %v378
      %v387 = vmul.f32 %v353, %v379
      %v388 = vmul.f32 %v356, %v380
      %v389 = vmul.f32 %v361, %v381
      %v390 = vmul.f32 %v364, %v382
      %v391 = vpack.c.bf16 %v384, %v383
      %v392 = vpack.c.bf16 %v386, %v385
      %v393 = vpack.c.bf16 %v388, %v387
      %v394 = vpack.c.bf16 %v390, %v389
      %v395 = vld [vmem:[%s3] sm:$0xf]
      %v396 = vld [vmem:[%s3 + $0x4] sm:$0xf]
      %v399 = vunpack.c.l.b16 %v395
      %v400 = vunpack.c.l.b16 %v396
      %v401 = vpack.c.b16 %v400, %v399
      %v404 = vsel %vm289, %v391, 0
      %v407 = vsel %vm289, %v392, 0
      %v410 = vsel %vm289, %v393, 0
      %v413 = vsel %vm289, %v394, 0
      %415 = vmatprep.subr.bf16.mxu0 0
      %416 = vmatpush1.bf16.msra.mxu0 0
      %417 = vmatprep.subr.bf16.mxu0 0
      %418 = vmatpush1.bf16.msra.mxu0 0
      %419 = vmatprep.subr.bf16.mxu0 0
      %420 = vmatpush1.bf16.msra.mxu0 0
      %421 = vmatprep.subr.bf16.mxu0 0
      %422 = vmatpush1.bf16.msra.mxu0 0
      %423 = vmatprep.subr.bf16.mxu0 0
      %424 = vmatpush1.bf16.msra.mxu0 0
      %425 = vmatprep.subr.bf16.mxu0 0
      %426 = vmatpush1.bf16.msra.mxu0 0
      %427 = vmatprep.subr.bf16.mxu0 0
      %428 = vmatpush1.bf16.msra.mxu0 0
      %429 = vmatprep.subr.bf16.mxu0 0
      %430 = vmatpush1.bf16.msra.mxu0 %v401
      %431 = vmatprep.subr.bf16.mxu0 0
      %432 = vmatpush2.bf16.msra.mxu0 0
      %433 = vmatprep.subr.bf16.mxu0 0
      %434 = vmatpush2.bf16.msra.mxu0 0
      %435 = vmatprep.subr.bf16.mxu0 0
      %436 = vmatpush2.bf16.msra.mxu0 0
      %437 = vmatprep.subr.bf16.mxu0 0
      %438 = vmatpush2.bf16.msra.mxu0 0
      %439 = vmatprep.subr.bf16.mxu0 0
      %440 = vmatpush2.bf16.msra.mxu0 0
      %441 = vmatprep.subr.bf16.mxu0 0
      %442 = vmatpush2.bf16.msra.mxu0 0
      %443 = vmatprep.subr.bf16.mxu0 0
      %444 = vmatpush2.bf16.msra.mxu0 0
      %445 = vmatprep.subr.bf16.mxu0 0
      %446 = vmatpush2.bf16.msra.mxu0 0
      %447 = vmatprep.mubr.bf16.mxu0 0
      %448 = vmatmul.mubr.bf16.gmra.mxu0 %v404
      %v449 = vpop.f32.mrf.mxu0
      %v450 = vadd.f32 0.0, %v449
      %v451 = vpop.f32.mrf.mxu0
      %v452 = vpop.f32.mrf.mxu0
      %v453 = vadd.f32 0.0, %v452
      %v454 = vpop.f32.mrf.mxu0
      %455 = vmatprep.mubr.bf16.mxu0 0
      %456 = vmatmul.mubr.bf16.gmra.mxu0 %v407
      %v457 = vpop.f32.mrf.mxu0
      %v458 = vadd.f32 0.0, %v457
      %v459 = vpop.f32.mrf.mxu0
      %v460 = vpop.f32.mrf.mxu0
      %v461 = vadd.f32 0.0, %v460
      %v462 = vpop.f32.mrf.mxu0
      %463 = vmatprep.mubr.bf16.mxu0 0
      %464 = vmatmul.mubr.bf16.gmra.mxu0 %v410
      %v465 = vpop.f32.mrf.mxu0
      %v466 = vadd.f32 0.0, %v465
      %v467 = vpop.f32.mrf.mxu0
      %v468 = vpop.f32.mrf.mxu0
      %v469 = vadd.f32 0.0, %v468
      %v470 = vpop.f32.mrf.mxu0
      %471 = vmatprep.mubr.bf16.mxu0 0
      %472 = vmatmul.mubr.bf16.gmra.mxu0 %v413
      %v473 = vpop.f32.mrf.mxu0
      %v474 = vadd.f32 0.0, %v473
      %v475 = vpop.f32.mrf.mxu0
      %v476 = vpop.f32.mrf.mxu0
      %v477 = vadd.f32 0.0, %v476
      %v478 = vpop.f32.mrf.mxu0
      %479 = vdwg.mxu0
      %s480 = smul.u32 %s15, 8
      %s481 = sshra.s32 %s480, 3
      %s482 = sand.u32 %s480, 7
      %s483 = smul.addr %s481, 4
      %s484 = scalar_lea.vmem %s1, %s483
      %v485 = vld [vmem:[%s484] sm:$0xf]
      %486 = vrot.lane.b32.xlu0 %v401, 122
      %v487 = vpop.permute.xlu0 %486
      %v490 = vsel %vm289, %v485, 0
      %492 = vmatprep.subr.bf16.mxu0 0
      %493 = vmatpush1.bf16.msra.mxu0 0
      %494 = vmatprep.subr.bf16.mxu0 0
      %495 = vmatpush1.bf16.msra.mxu0 0
      %496 = vmatprep.subr.bf16.mxu0 0
      %497 = vmatpush1.bf16.msra.mxu0 0
      %498 = vmatprep.subr.bf16.mxu0 0
      %499 = vmatpush1.bf16.msra.mxu0 0
      %500 = vmatprep.subr.bf16.mxu0 0
      %501 = vmatpush1.bf16.msra.mxu0 0
      %502 = vmatprep.subr.bf16.mxu0 0
      %503 = vmatpush1.bf16.msra.mxu0 0
      %504 = vmatprep.subr.bf16.mxu0 0
      %505 = vmatpush1.bf16.msra.mxu0 0
      %506 = vmatprep.subr.bf16.mxu0 0
      %507 = vmatpush1.bf16.msra.mxu0 %v487
      %508 = vmatprep.subr.bf16.mxu0 0
      %509 = vmatpush2.bf16.msra.mxu0 0
      %510 = vmatprep.subr.bf16.mxu0 0
      %511 = vmatpush2.bf16.msra.mxu0 0
      %512 = vmatprep.subr.bf16.mxu0 0
      %513 = vmatpush2.bf16.msra.mxu0 0
      %514 = vmatprep.subr.bf16.mxu0 0
      %515 = vmatpush2.bf16.msra.mxu0 0
      %516 = vmatprep.subr.bf16.mxu0 0
      %517 = vmatpush2.bf16.msra.mxu0 0
      %518 = vmatprep.subr.bf16.mxu0 0
      %519 = vmatpush2.bf16.msra.mxu0 0
      %520 = vmatprep.subr.bf16.mxu0 0
      %521 = vmatpush2.bf16.msra.mxu0 0
      %522 = vmatprep.subr.bf16.mxu0 0
      %523 = vmatpush2.bf16.msra.mxu0 0
      %524 = vmatprep.mubr.bf16.mxu0 0
      %525 = vmatmul.mubr.bf16.gmra.mxu0 %v490
      %v526 = vpop.f32.mrf.mxu0
      %v527 = vadd.f32 0.0, %v526
      %v528 = vpop.f32.mrf.mxu0
      %v529 = vpop.f32.mrf.mxu0
      %v530 = vpop.f32.mrf.mxu0
      %531 = vdwg.mxu0
      %v533 = vcombine.high %v527, %v527
      %v535 = vunpack.c.l.s4 1966171168
      %v536 = vunpack.c.0.s8 %v535
      %v537 = vlaneseq
      %v538 = vshrl.u32 %v537, 7
      %v539 = vsub.s32 %v536, %v538
      %v540 = vrot.slane %v527, %v539
      %v542 = vunpack.c.l.s4 1966171168
      %v543 = vunpack.c.0.s8 %v542
      %v544 = vlaneseq
      %v545 = vshrl.u32 %v544, 7
      %v546 = vsub.s32 %v543, %v545
      %v547 = vrot.slane %v533, %v546
      %v548 = vcombine.high %v540, %v540
      %v549 = vcombine.high %v547, %v547
      %v551 = vunpack.c.l.s4 1966171168
      %v552 = vunpack.c.0.s8 %v551
      %v553 = vlaneseq
      %v554 = vshrl.u32 %v553, 7
      %v555 = vsub.s32 %v552, %v554
      %v556 = vrot.slane %v540, %v555
      %v558 = vunpack.c.l.s4 1966171168
      %v559 = vunpack.c.0.s8 %v558
      %v560 = vlaneseq
      %v561 = vshrl.u32 %v560, 7
      %v562 = vsub.s32 %v559, %v561
      %v563 = vrot.slane %v547, %v562
      %v565 = vunpack.c.l.s4 1966171168
      %v566 = vunpack.c.0.s8 %v565
      %v567 = vlaneseq
      %v568 = vshrl.u32 %v567, 7
      %v569 = vsub.s32 %v566, %v568
      %v570 = vrot.slane %v548, %v569
      %v572 = vunpack.c.l.s4 1966171168
      %v573 = vunpack.c.0.s8 %v572
      %v574 = vlaneseq
      %v575 = vshrl.u32 %v574, 7
      %v576 = vsub.s32 %v573, %v575
      %v577 = vrot.slane %v549, %v576
      %v578 = vcombine.high %v556, %v556
      %v579 = vcombine.high %v563, %v563
      %v580 = vcombine.high %v570, %v570
      %v581 = vcombine.high %v577, %v577
      %v582 = vlaneseq
      %v583 = vshrl.u32 %v582, 7
      %v584 = vsub.s32 0, %v583
      %v585 = vrot.slane %v556, %v584
      %v586 = vlaneseq
      %v587 = vshrl.u32 %v586, 7
      %v588 = vsub.s32 0, %v587
      %v589 = vrot.slane %v570, %v588
      %v590 = vlaneseq
      %v591 = vshrl.u32 %v590, 7
      %v592 = vsub.s32 0, %v591
      %v593 = vrot.slane %v578, %v592
      %v594 = vlaneseq
      %v595 = vshrl.u32 %v594, 7
      %v596 = vsub.s32 0, %v595
      %v597 = vrot.slane %v580, %v596
      %v598 = vlaneseq
      %v599 = vshrl.u32 %v598, 7
      %v600 = vsub.s32 0, %v599
      %v601 = vrot.slane %v563, %v600
      %v602 = vlaneseq
      %v603 = vshrl.u32 %v602, 7
      %v604 = vsub.s32 0, %v603
      %v605 = vrot.slane %v577, %v604
      %v606 = vlaneseq
      %v607 = vshrl.u32 %v606, 7
      %v608 = vsub.s32 0, %v607
      %v609 = vrot.slane %v579, %v608
      %v610 = vlaneseq
      %v611 = vshrl.u32 %v610, 7
      %v612 = vsub.s32 0, %v611
      %v613 = vrot.slane %v581, %v612
      %614 = vrot.lane.b32.xlu0 %v585, 3
      %v615 = vpop.permute.xlu0 %614
      %616 = vrot.lane.b32.xlu0 %v589, 3
      %v617 = vpop.permute.xlu0 %616
      %618 = vrot.lane.b32.xlu0 %v593, 3
      %v619 = vpop.permute.xlu0 %618
      %620 = vrot.lane.b32.xlu0 %v597, 3
      %v621 = vpop.permute.xlu0 %620
      %622 = vrot.lane.b32.xlu0 %v601, 3
      %v623 = vpop.permute.xlu0 %622
      %624 = vrot.lane.b32.xlu0 %v605, 3
      %v625 = vpop.permute.xlu0 %624
      %626 = vrot.lane.b32.xlu0 %v609, 3
      %v627 = vpop.permute.xlu0 %626
      %628 = vrot.lane.b32.xlu0 %v613, 3
      %v629 = vpop.permute.xlu0 %628
      %v638 = vadd.f32 %v450, %v615
      %v639 = vadd.f32 %v453, %v617
      %v640 = vadd.f32 %v458, %v619
      %v641 = vadd.f32 %v461, %v621
      %v642 = vadd.f32 %v466, %v623
      %v643 = vadd.f32 %v469, %v625
      %v644 = vadd.f32 %v474, %v627
      %v645 = vadd.f32 %v477, %v629
      %vm646 = vcmp.gt.f32.partialorder %v638, 0.0
      %vm647 = vcmp.gt.f32.partialorder %v639, 0.0
      %vm648 = vcmp.gt.f32.partialorder %v640, 0.0
      %vm649 = vcmp.gt.f32.partialorder %v641, 0.0
      %vm650 = vcmp.gt.f32.partialorder %v642, 0.0
      %vm651 = vcmp.gt.f32.partialorder %v643, 0.0
      %vm652 = vcmp.gt.f32.partialorder %v644, 0.0
      %vm653 = vcmp.gt.f32.partialorder %v645, 0.0
      %v654 = vmul.f32 %v638, 0.01
      %v655 = vmul.f32 %v639, 0.01
      %v656 = vmul.f32 %v640, 0.01
      %v657 = vmul.f32 %v641, 0.01
      %v658 = vmul.f32 %v642, 0.01
      %v659 = vmul.f32 %v643, 0.01
      %v660 = vmul.f32 %v644, 0.01
      %v661 = vmul.f32 %v645, 0.01
      %v662 = vsel %vm646, %v638, %v654
      %v663 = vsel %vm647, %v639, %v655
      %v664 = vsel %vm648, %v640, %v656
      %v665 = vsel %vm649, %v641, %v657
      %v666 = vsel %vm650, %v642, %v658
      %v667 = vsel %vm651, %v643, %v659
      %v668 = vsel %vm652, %v644, %v660
      %v669 = vsel %vm653, %v645, %v661
      %vm670 = vcmask 48152
      %v671 = vsel %vm670, %v662, -inf
      %v672 = vrot.slane %v671, 4
      %v673 = vmax.f32 %v671, %v672
      %v674 = vrot.slane %v673, 2
      %v675 = vmax.f32 %v673, %v674
      %v676 = vrot.slane %v675, 1
      %v677 = vmax.f32 %v675, %v676
      %v678 = vsel %vm670, %v663, -inf
      %v679 = vrot.slane %v678, 4
      %v680 = vmax.f32 %v678, %v679
      %v681 = vrot.slane %v680, 2
      %v682 = vmax.f32 %v680, %v681
      %v683 = vrot.slane %v682, 1
      %v684 = vmax.f32 %v682, %v683
      %v685 = vsel %vm670, %v664, -inf
      %v686 = vrot.slane %v685, 4
      %v687 = vmax.f32 %v685, %v686
      %v688 = vrot.slane %v687, 2
      %v689 = vmax.f32 %v687, %v688
      %v690 = vrot.slane %v689, 1
      %v691 = vmax.f32 %v689, %v690
      %v692 = vsel %vm670, %v665, -inf
      %v693 = vrot.slane %v692, 4
      %v694 = vmax.f32 %v692, %v693
      %v695 = vrot.slane %v694, 2
      %v696 = vmax.f32 %v694, %v695
      %v697 = vrot.slane %v696, 1
      %v698 = vmax.f32 %v696, %v697
      %v699 = vsel %vm670, %v666, -inf
      %v700 = vrot.slane %v699, 4
      %v701 = vmax.f32 %v699, %v700
      %v702 = vrot.slane %v701, 2
      %v703 = vmax.f32 %v701, %v702
      %v704 = vrot.slane %v703, 1
      %v705 = vmax.f32 %v703, %v704
      %v706 = vsel %vm670, %v667, -inf
      %v707 = vrot.slane %v706, 4
      %v708 = vmax.f32 %v706, %v707
      %v709 = vrot.slane %v708, 2
      %v710 = vmax.f32 %v708, %v709
      %v711 = vrot.slane %v710, 1
      %v712 = vmax.f32 %v710, %v711
      %v713 = vsel %vm670, %v668, -inf
      %v714 = vrot.slane %v713, 4
      %v715 = vmax.f32 %v713, %v714
      %v716 = vrot.slane %v715, 2
      %v717 = vmax.f32 %v715, %v716
      %v718 = vrot.slane %v717, 1
      %v719 = vmax.f32 %v717, %v718
      %v720 = vsel %vm670, %v669, -inf
      %v721 = vrot.slane %v720, 4
      %v722 = vmax.f32 %v720, %v721
      %v723 = vrot.slane %v722, 2
      %v724 = vmax.f32 %v722, %v723
      %v725 = vrot.slane %v724, 1
      %v726 = vmax.f32 %v724, %v725
      %v727 = vsub.f32 %v662, %v677
      %v728 = vsub.f32 %v663, %v684
      %v729 = vsub.f32 %v664, %v691
      %v730 = vsub.f32 %v665, %v698
      %v731 = vsub.f32 %v666, %v705
      %v732 = vsub.f32 %v667, %v712
      %v733 = vsub.f32 %v668, %v719
      %v734 = vsub.f32 %v669, %v726
      %v735 = vmul.f32 %v727, 1.442695
      %v736 = vpow.pop %v735
      %v737 = vmul.f32 %v728, 1.442695
      %v738 = vpow.pop %v737
      %v739 = vmul.f32 %v729, 1.442695
      %v740 = vpow.pop %v739
      %v741 = vmul.f32 %v730, 1.442695
      %v742 = vpow.pop %v741
      %v743 = vmul.f32 %v731, 1.442695
      %v744 = vpow.pop %v743
      %v745 = vmul.f32 %v732, 1.442695
      %v746 = vpow.pop %v745
      %v747 = vmul.f32 %v733, 1.442695
      %v748 = vpow.pop %v747
      %v749 = vmul.f32 %v734, 1.442695
      %v750 = vpow.pop %v749
      %v751 = vsel %vm670, %v736, 0.0
      %v752 = vrot.slane %v751, 4
      %v753 = vadd.f32 %v751, %v752
      %v754 = vrot.slane %v753, 2
      %v755 = vadd.f32 %v753, %v754
      %v756 = vrot.slane %v755, 1
      %v757 = vadd.f32 %v755, %v756
      %v758 = vsel %vm670, %v738, 0.0
      %v759 = vrot.slane %v758, 4
      %v760 = vadd.f32 %v758, %v759
      %v761 = vrot.slane %v760, 2
      %v762 = vadd.f32 %v760, %v761
      %v763 = vrot.slane %v762, 1
      %v764 = vadd.f32 %v762, %v763
      %v765 = vsel %vm670, %v740, 0.0
      %v766 = vrot.slane %v765, 4
      %v767 = vadd.f32 %v765, %v766
      %v768 = vrot.slane %v767, 2
      %v769 = vadd.f32 %v767, %v768
      %v770 = vrot.slane %v769, 1
      %v771 = vadd.f32 %v769, %v770
      %v772 = vsel %vm670, %v742, 0.0
      %v773 = vrot.slane %v772, 4
      %v774 = vadd.f32 %v772, %v773
      %v775 = vrot.slane %v774, 2
      %v776 = vadd.f32 %v774, %v775
      %v777 = vrot.slane %v776, 1
      %v778 = vadd.f32 %v776, %v777
      %v779 = vsel %vm670, %v744, 0.0
      %v780 = vrot.slane %v779, 4
      %v781 = vadd.f32 %v779, %v780
      %v782 = vrot.slane %v781, 2
      %v783 = vadd.f32 %v781, %v782
      %v784 = vrot.slane %v783, 1
      %v785 = vadd.f32 %v783, %v784
      %v786 = vsel %vm670, %v746, 0.0
      %v787 = vrot.slane %v786, 4
      %v788 = vadd.f32 %v786, %v787
      %v789 = vrot.slane %v788, 2
      %v790 = vadd.f32 %v788, %v789
      %v791 = vrot.slane %v790, 1
      %v792 = vadd.f32 %v790, %v791
      %v793 = vsel %vm670, %v748, 0.0
      %v794 = vrot.slane %v793, 4
      %v795 = vadd.f32 %v793, %v794
      %v796 = vrot.slane %v795, 2
      %v797 = vadd.f32 %v795, %v796
      %v798 = vrot.slane %v797, 1
      %v799 = vadd.f32 %v797, %v798
      %v800 = vsel %vm670, %v750, 0.0
      %v801 = vrot.slane %v800, 4
      %v802 = vadd.f32 %v800, %v801
      %v803 = vrot.slane %v802, 2
      %v804 = vadd.f32 %v802, %v803
      %v805 = vrot.slane %v804, 1
      %v806 = vadd.f32 %v804, %v805
      %v807 = vrcp.pop %v757
      %v808 = vrcp.pop %v764
      %v809 = vrcp.pop %v771
      %v810 = vrcp.pop %v778
      %v811 = vrcp.pop %v785
      %v812 = vrcp.pop %v792
      %v813 = vrcp.pop %v799
      %v814 = vrcp.pop %v806
      %v815 = vmul.f32 %v736, %v807
      %v816 = vmul.f32 %v738, %v808
      %v817 = vmul.f32 %v740, %v809
      %v818 = vmul.f32 %v742, %v810
      %v819 = vmul.f32 %v744, %v811
      %v820 = vmul.f32 %v746, %v812
      %v821 = vmul.f32 %v748, %v813
      %v822 = vmul.f32 %v750, %v814
      %831 = vrot.lane.b32.xlu0 %v450, 3
      %v832 = vpop.permute.xlu0 %831
      %833 = vrot.lane.b32.xlu0 %v453, 3
      %v834 = vpop.permute.xlu0 %833
      %835 = vrot.lane.b32.xlu0 %v458, 3
      %v836 = vpop.permute.xlu0 %835
      %837 = vrot.lane.b32.xlu0 %v461, 3
      %v838 = vpop.permute.xlu0 %837
      %839 = vrot.lane.b32.xlu0 %v466, 3
      %v840 = vpop.permute.xlu0 %839
      %841 = vrot.lane.b32.xlu0 %v469, 3
      %v842 = vpop.permute.xlu0 %841
      %843 = vrot.lane.b32.xlu0 %v474, 3
      %v844 = vpop.permute.xlu0 %843
      %845 = vrot.lane.b32.xlu0 %v477, 3
      %v846 = vpop.permute.xlu0 %845
      %v855 = vmul.f32 %v815, %v832
      %v856 = vmul.f32 %v816, %v834
      %v857 = vmul.f32 %v817, %v836
      %v858 = vmul.f32 %v818, %v838
      %v859 = vmul.f32 %v819, %v840
      %v860 = vmul.f32 %v820, %v842
      %v861 = vmul.f32 %v821, %v844
      %v862 = vmul.f32 %v822, %v846
      %871 = vrot.lane.b32.xlu0 %v855, 125
      %v872 = vpop.permute.xlu0 %871
      %873 = vrot.lane.b32.xlu0 %v856, 125
      %v874 = vpop.permute.xlu0 %873
      %875 = vrot.lane.b32.xlu0 %v857, 125
      %v876 = vpop.permute.xlu0 %875
      %877 = vrot.lane.b32.xlu0 %v858, 125
      %v878 = vpop.permute.xlu0 %877
      %879 = vrot.lane.b32.xlu0 %v859, 125
      %v880 = vpop.permute.xlu0 %879
      %881 = vrot.lane.b32.xlu0 %v860, 125
      %v882 = vpop.permute.xlu0 %881
      %883 = vrot.lane.b32.xlu0 %v861, 125
      %v884 = vpop.permute.xlu0 %883
      %885 = vrot.lane.b32.xlu0 %v862, 125
      %v886 = vpop.permute.xlu0 %885
      %vm895 = vcmask 23552
      %v896 = vsel %vm895, %v872, 0.0
      %v897 = vsel %vm895, %v874, 0.0
      %v898 = vadd.f32 %v896, %v897
      %v899 = vsel %vm895, %v876, 0.0
      %v900 = vadd.f32 %v898, %v899
      %v901 = vsel %vm895, %v878, 0.0
      %v902 = vadd.f32 %v900, %v901
      %v903 = vsel %vm895, %v880, 0.0
      %v904 = vadd.f32 %v902, %v903
      %v905 = vsel %vm895, %v882, 0.0
      %v906 = vadd.f32 %v904, %v905
      %v907 = vsel %vm895, %v884, 0.0
      %v908 = vadd.f32 %v906, %v907
      %v909 = vsel %vm895, %v886, 0.0
      %v910 = vadd.f32 %v908, %v909
      %911 = vadd.xlane.f32.xlu0 %v910
      %v912 = vpop.xlane.xlu0 %911
      %v913 = vrot.slane %v912, 4
      %v914 = vadd.f32 %v912, %v913
      %v915 = vrot.slane %v914, 2
      %v916 = vadd.f32 %v914, %v915
      %v917 = vrot.slane %v916, 1
      %v918 = vadd.f32 %v916, %v917
      %s919 = vtos %v918
      %v920 = vstv %s919
      %vm921 = vcmask 0
      %922 = vst.msk [vmem:[%s217] sm:$0x1] %vm921, %v920
      %p923 = scmp.lt.s32.totalorder %s15, 1
      %s924 = scalar_select %p923, %s15, 1
      %s925 = scalar_lea.vmem %s4, %s924
      // Predicated region
      $region37: #{tpu_custom_call.1} parent=35 // pred_check
        %p926 = pneg %p127
      $region38: #{tpu_custom_call.1} parent=35 // pred_check_branch
        %928 = sbr.rel (%p926) target = $region40
      $region39: #{tpu_custom_call.1} parent=35 // pred_region
        _
      $region40: #{tpu_custom_call.1} parent=35 // pred_fallthru
        _
    $region36: #{tpu_custom_call.1} parent=5 // pred_fallthru
      _
    %p929 = scmp.le.s32.totalorder 2, %s10
    // Predicated region
    $region41: #{tpu_custom_call.1} parent=5 // pred_check
      %p930 = pneg %p929
    $region42: #{tpu_custom_call.1} parent=5 // pred_check_branch
      %932 = sbr.rel (%p930) target = $region44
    $region43: #{tpu_custom_call.1} parent=5 // pred_region
      %s933 = ssub.s32 %s10, 2
      // Predicated region
      $region45: #{tpu_custom_call.1} parent=43 // pred_check
        %p934 = pneg %p133
      $region46: #{tpu_custom_call.1} parent=43 // pred_check_branch
        %936 = sbr.rel (%p934) target = $region48
      $region47: #{tpu_custom_call.1} parent=43 // pred_region
        %p937 = scmp.lt.s32.totalorder %s16, 1
        %s938 = scalar_select %p937, %s16, 1
        %s939 = scalar_lea.vmem %s4, %s938
      $region48: #{tpu_custom_call.1} parent=43 // pred_fallthru
        _
    $region44: #{tpu_custom_call.1} parent=5 // pred_fallthru
      _
  $region6: #{tpu_custom_call.1} parent=0 // loop_footer
    %s14 = sadd.s32 1, %s10
  $region7: #{tpu_custom_call.1} parent=0 // loop_footer_branch
    %9 = sbr.rel target = $region3
  $region8: #{tpu_custom_call.1} parent=0 // loop_exit
    _

</llo_original>
